<compile_context>
chip_gen: v7x
topology: tpu7x:2x2x1
jax: 0.10.0
libtpu: 0.0.40
codegen_flags: <defaults>
</compile_context>

<pallas_src>
import functools
import math

import jax
import jax.numpy as jnp
from jax.experimental import pallas as pl
from jax.experimental.pallas import tpu as pltpu


def _roll_kernel(mask_ref, x_ref, o_ref, *, h):
    """Lane-dense path: last dim W is a multiple of 128.

    mask_ref: (1, W) int32; nonzero where the lane is in the first half of its
    C-sized group (partner at +h lanes), zero otherwise (partner at -h lanes).
    """
    x = x_ref[...]                               # (row_block, W)
    W = x.shape[-1]
    lane_axis = x.ndim - 1                       # pltpu.roll needs a non-negative axis
    # Partner of lane p is p+h (first half of its group) or p-h (second half).
    # Neither roll ever wraps across a group for the lanes it actually feeds.
    fwd = pltpu.roll(x, W - h, axis=lane_axis)   # fwd[p] = x[(p + h) % W]
    bwd = pltpu.roll(x, h, axis=lane_axis)       # bwd[p] = x[(p - h) % W]
    first = mask_ref[...] != 0                   # (1, W) -> broadcast over sublanes
    o_ref[...] = jnp.where(first, jnp.maximum(x, fwd), jnp.minimum(x, bwd))


def _split_kernel(x_ref, o_ref, *, h):
    """Aligned-split path (h % 128 == 0): plain max/min of the two halves."""
    x = x_ref[...]
    a = x[:, :h]
    b = x[:, h:]
    o_ref[:, :h] = jnp.maximum(a, b)
    o_ref[:, h:] = jnp.minimum(a, b)


def _round_up(v, m):
    return ((v + m - 1) // m) * m


def _vmem_budget_bytes():
    """Generation-aware scoped-VMEM request (bytes)."""
    try:
        phys = pltpu.get_tpu_info().vmem_capacity_bytes
    except Exception:
        phys = 64 * 1024 * 1024           # conservative: v7x per-TensorCore VMEM
    # Leave headroom for Mosaic internals; ~52 MiB on v7x, 100 MiB on v5e/v6e.
    return max(32 * 1024 * 1024, min(phys - 12 * 1024 * 1024, 100 * 1024 * 1024))


def group_sort(x, group_size=2, axis=-1, new_impl=True, *, block_bytes=None):
    # TODO(synk): generic `group_size != 2` / arbitrary-axis sort path (view +
    # per-group sort) is not implemented; only the default new_impl,
    # group_size==2, axis=-1 path is.
    assert new_impl and group_size == 2, "Pallas kernel covers new_impl, group_size=2"
    assert axis in (-1, x.ndim - 1), "Pallas kernel covers axis=-1 (default)"

    C = x.shape[-1]
    assert C % 2 == 0
    h = C // 2
    if x.size == 0:
        return x

    dtype = x.dtype
    itemsize = jnp.dtype(dtype).itemsize
    sub = max(8, 32 // itemsize)          # sublane tile: 8 f32 / 16 bf16 / 32 i8
    rows = x.size // C

    vmem_limit = _vmem_budget_bytes()
    if block_bytes is None:
        # input + output are each double-buffered -> ~4 live blocks; headroom.
        block_bytes = max(1 << 20, vmem_limit // 4 - (1 << 20))

    # ---- lane-dense 2-D view (R, W) -------------------------------------
    pad_rows = 0
    if h % 128 == 0:
        # Both halves are already lane-aligned; no rolls needed.
        k = 1
    else:
        k = 128 // math.gcd(C, 128)       # smallest k with (k*C) % 128 == 0
        if rows % k != 0:
            # Pad trailing rows so the lane-dense roll path still applies.
            # TODO(synk): the pad/slice costs one extra HBM copy; still beats
            # masked narrow stores for small C.
            pad_rows = _round_up(rows, k) - rows
    # TODO(synk): for non-power-of-two C (W > 128) the rolls cross vreg lane
    # boundaries; on v7x padding C to the next divisor of 128 would keep the
    # XLU off the critical path.
    W = C * k
    R = (rows + pad_rows) // k

    # ---- block sizing: ~block_bytes per block, sublane aligned, >=2 steps ---
    desired = max(sub, (block_bytes // (W * itemsize)) // sub * sub)
    two_step_cap = max(sub, _round_up(pl.cdiv(R, 2), sub))
    row_block = min(desired, two_step_cap)
    if row_block >= R:
        row_block = R                     # single full block (tiny inputs)
    grid = (pl.cdiv(R, row_block),)
    # TODO(synk): add a second grid axis over the lane dim (column tiling) for
    # extremely wide C where even a (sub, W) block would blow the VMEM budget.

    # ---- build inputs -----------------------------------------------------
    x2 = x.reshape(rows, C)
    if pad_rows:
        x2 = jnp.pad(x2, ((0, pad_rows), (0, 0)))
    x2 = x2.reshape(R, W)                 # pure reshape (no data movement) when no pad

    io_spec = pl.BlockSpec((row_block, W), lambda i: (i, 0))
    if h % 128 == 0:
        kernel = functools.partial(_split_kernel, h=h)
        in_specs = [io_spec]
        args = (x2,)
    else:
        kernel = functools.partial(_roll_kernel, h=h)
        mask = ((jnp.arange(W, dtype=jnp.int32) % C) < h).astype(jnp.int32)
        in_specs = [pl.BlockSpec((1, W), lambda i: (0, 0)), io_spec]
        args = (mask.reshape(1, W), x2)

    # TODO(synk): expose input_output_aliases for callers that can donate x.
    out2 = pl.pallas_call(
        kernel,
        out_shape=jax.ShapeDtypeStruct((R, W), dtype),
        grid=grid,
        in_specs=in_specs,
        out_specs=io_spec,
        compiler_params=pltpu.CompilerParams(
            dimension_semantics=("parallel",),
            vmem_limit_bytes=vmem_limit,
        ),
        cost_estimate=pl.CostEstimate(
            flops=R * W,                          # one max/min per element
            transcendentals=0,
            bytes_accessed=2 * R * W * itemsize,  # pure streaming read+write
        ),
    )(*args)

    out2 = out2.reshape(rows + pad_rows, C)
    if pad_rows:
        out2 = out2[:rows]
    return out2.reshape(x.shape)


class GroupSort:
    """Mirror of the PyTorch GroupSort module (no parameters)."""

    def __init__(self, group_size, axis=-1, new_impl=True):
        self.group_size = group_size
        self.axis = axis
        self.new_impl = new_impl

    def lipschitz_constant(self):
        return 1

    def __call__(self, x):
        return group_sort(x, self.group_size, self.axis, self.new_impl)


def _ref_group_sort2(x):
    h = x.shape[-1] // 2
    a, b = x[..., :h], x[..., h:]
    return jnp.concatenate([jnp.maximum(a, b), jnp.minimum(a, b)], axis=-1)


if __name__ == "__main__":
    key = jax.random.PRNGKey(0)
    k0, k1, k2, k3 = jax.random.split(key, 4)
    mod = GroupSort(group_size=2, axis=-1, new_impl=True)

    # Main case: NCHW-style activation, C=16 -> lane-dense roll path (W=128).
    x = jax.random.normal(k0, (2, 4, 16, 16), dtype=jnp.float32)
    y = jax.block_until_ready(mod(x))
    assert y.shape == x.shape and y.dtype == x.dtype
    assert jnp.array_equal(y, _ref_group_sort2(x))

    # Wide-channel case: C=256 (h=128) -> aligned-split path, 2 grid steps.
    x2 = jax.random.normal(k1, (4, 8, 256), dtype=jnp.float32)
    y2 = jax.block_until_ready(group_sort(x2))
    assert jnp.array_equal(y2, _ref_group_sort2(x2))

    # Multi-block grid with a ragged last block (tiny block_bytes forces tiling).
    x3 = jax.random.normal(k2, (2, 100, 16), dtype=jnp.float32)
    y3 = jax.block_until_ready(group_sort(x3, block_bytes=4096))
    assert jnp.array_equal(y3, _ref_group_sort2(x3))

    # Awkward shape: rows not divisible by 128/gcd(C,128) -> padded roll path.
    x4 = jax.random.normal(k3, (3, 5, 6), dtype=jnp.float32)
    y4 = jax.block_until_ready(group_sort(x4))
    assert jnp.array_equal(y4, _ref_group_sort2(x4))

    print("KERNEL_OK")
</pallas_src>

<mosaic_0001>
module attributes {stable_mosaic.version = 11 : i64} {
  func.func @_roll_kernel(%arg0: i32, %arg1: memref<1x128xi32, #tpu.memory_space<vmem>>, %arg2: memref<8x128xf32, #tpu.memory_space<vmem>>, %arg3: memref<8x128xf32, #tpu.memory_space<vmem>>) attributes {dimension_semantics = [#tpu.dimension_semantics<parallel>], iteration_bounds = array<i64: 2>, scalar_prefetch = 0 : i64, scratch_operands = 0 : i64, tpu.core_type = #tpu.core_type<tc>, window_params = [{pipeline_mode = #tpu.pipeline_mode<synchronous>, transform_indices = @transform_0, window_bounds = array<i64: 1, 128>}, {transform_indices = @transform_1, window_bounds = array<i64: 8, 128>}, {transform_indices = @transform_2, window_bounds = array<i64: 8, 128>}]} {
    %c0 = arith.constant 0 : index
    %c0_0 = arith.constant 0 : index
    %0 = vector.load %arg2[%c0, %c0_0] : memref<8x128xf32, #tpu.memory_space<vmem>>, vector<8x128xf32>
    %c120_i32 = arith.constant 120 : i32
    %1 = tpu.dynamic_rotate %0 by %c120_i32 dim 1 : vector<8x128xf32>, i32 -> vector<8x128xf32>
    %c8_i32 = arith.constant 8 : i32
    %2 = tpu.dynamic_rotate %0 by %c8_i32 dim 1 : vector<8x128xf32>, i32 -> vector<8x128xf32>
    %c0_1 = arith.constant 0 : index
    %c0_2 = arith.constant 0 : index
    %3 = vector.load %arg1[%c0_1, %c0_2] : memref<1x128xi32, #tpu.memory_space<vmem>>, vector<1x128xi32>
    %c0_i32 = arith.constant 0 : i32
    %4 = vector.broadcast %c0_i32 : i32 to vector<1x128xi32>
    %5 = arith.cmpi ne, %3, %4 : vector<1x128xi32>
    %6 = arith.maximumf %0, %1 : vector<8x128xf32>
    %7 = arith.minimumf %0, %2 : vector<8x128xf32>
    %8 = vector.shape_cast %5 : vector<1x128xi1> to vector<1x128xi1>
    %9 = vector.broadcast %8 : vector<1x128xi1> to vector<8x128xi1>
    %10 = arith.select %9, %6, %7 : vector<8x128xi1>, vector<8x128xf32>
    %c0_3 = arith.constant 0 : index
    %c0_4 = arith.constant 0 : index
    %11 = vector.load %arg3[%c0_3, %c0_4] : memref<8x128xf32, #tpu.memory_space<vmem>>, vector<8x128xf32>
    tpu.vector_store %arg3[%c0_3, %c0_4], %10 {strides = array<i32>} : memref<8x128xf32, #tpu.memory_space<vmem>>, vector<8x128xf32>,
    return
  }
  func.func @transform_0(%arg0: i32) -> (i32, i32) {
    %c0_i32 = arith.constant 0 : i32
    %c0_i32_0 = arith.constant 0 : i32
    %c0_i32_1 = arith.constant 0 : i32
    return %c0_i32, %c0_i32_0 : i32, i32
  }
  func.func @transform_1(%arg0: i32) -> (i32, i32) {
    %c0_i32 = arith.constant 0 : i32
    %c0_i32_0 = arith.constant 0 : i32
    return %arg0, %c0_i32 : i32, i32
  }
  func.func @transform_2(%arg0: i32) -> (i32, i32) {
    %c0_i32 = arith.constant 0 : i32
    %c0_i32_0 = arith.constant 0 : i32
    return %arg0, %c0_i32 : i32, i32
  }
}

</mosaic_0001>

<llo_original>
// kernel: tpu_custom_call.1
$region0: #{tpu_custom_call.1}
  #allocation0 [shape = 'u32[]', space=smem, size = 0x4, offset = 0x4, fixed_abs, tag = 'smem constant byte address 0x4 - core index']
  #allocation1 [shape = 'u32[144,128]{1,0:T(1,128)}', space=vmem, size = 0x12000, scoped, tag = 'internal scratch']
  %s0 = inlined_call_operand.hbm [shape: s32[1,128], index: 0, kind: input, shape index: {}]
  %s1 = inlined_call_operand.hbm [shape: f32[16,128], index: 1, kind: input, shape index: {}]
  %s2 = inlined_call_operand.hbm [shape: f32[16,128], index: 2, kind: output, shape index: {}]
  %s3 = sld [smem:[#allocation0]]
  $region49: #{tpu_custom_call.1} parent=0
    _
  %s5 = ssub.s32 1, %s3
  %s6 = scalar_select 0, %s5, %s3
  $region1: #{tpu_custom_call.1} parent=0
    #allocation2 [shape = 'u8[512]{0}', space=vmem, size = 0x400, scoped, tag = 'input window, operand 0, single buffered']
    #allocation3 [shape = 's32[2]{0}', space=sflag, size = 0x8, scoped, tag = 'scoped memory for tpu_custom_call.1']
    #allocation4 [shape = 's32[2]{0}', space=sflag, size = 0x8, scoped, tag = 'scoped memory for tpu_custom_call.1']
    #allocation5 [shape = 'u8[8192]{0}', space=vmem, size = 0x2000, scoped, tag = 'input window, operand 1']
    #allocation6 [shape = 's32[2]{0}', space=sflag, size = 0x8, scoped, tag = 'scoped memory for tpu_custom_call.1']
    #allocation7 [shape = 'u8[8192]{0}', space=vmem, size = 0x2000, scoped, tag = 'output window, operand 0']
    %7 = vsyncpa [#allocation3], 0
    %8 = vsyncpa [#allocation6], 0
    %s9 = scalar_lea.sflag [#allocation6], 1
    %10 = vsyncpa %s9, 0
    %11 = vsyncpa [#allocation4], 0
    %s12 = scalar_lea.sflag [#allocation4], 1
    %13 = vsyncpa %s12, 0
    loop: start=0, step=1, limit=4
    $region2: #{tpu_custom_call.1} parent=1 // loop_pre_header
      _
    $region3: #{tpu_custom_call.1} parent=1 // loop_header
      %s15 = sphi 0, %s19
      %p16 = scmp.ge.s32.totalorder %s15, 4
      %s23 = sphi 0, %s23
      %s25 = sphi 0, %s23
      %s26 = sphi 0, %s25
      %s40 = sphi 0, %s26
      %s46 = sphi 0, %s48
      %s49 = sphi 0, %s46
      %s50 = sphi 0, %s49
      %s66 = sphi 0, %s50
      %s72 = sphi 0, %s74
      %s75 = sphi 0, %s72
      %s76 = sphi 0, %s75
      %s92 = sphi 0, %s76
    $region4: #{tpu_custom_call.1} parent=1 // loop_header_branch
      %18 = sbr.rel (%p16) target = $region8
    $region5: #{tpu_custom_call.1} parent=1 // loop_body
      %s20 = ssub.s32 %s15, 1
      %s21 = ssub.s32 %s15, 2
      %s22 = sadd.s32 %s15, 1
      %s24 = sadd.s32 %s23, 1
      %p27 = scmp.eq.s32.totalorder %s15, 1
      %p28 = scmp.ne.s32.totalorder %s23, %s25
      %p29 = scmp.eq.s32.totalorder %s15, 0
      %p30 = por %p28, %p29
      %p31 = scmp.ne.s32.totalorder %s23, %s25
      %p32 = scmp.eq.s32.totalorder %s20, 1
      %p33 = por %p31, %p32
      %p34 = scmp.ne.s32.totalorder %s25, %s26
      %p35 = scmp.eq.s32.totalorder %s20, 0
      %p36 = por %p34, %p35
      %p37 = scmp.ne.s32.totalorder %s25, %s26
      %p38 = scmp.eq.s32.totalorder %s21, 1
      %p39 = por %p37, %p38
      %p41 = scmp.ne.s32.totalorder %s26, %s40
      %p42 = scmp.eq.s32.totalorder %s21, 0
      %p43 = por %p41, %p42
      %s44 = ssub.s32 %s15, %s22
      %p45 = scmp.eq.s32.totalorder %s44, 0
      %s47 = sadd.s32 %s46, 1
      %s48 = scalar_select %p45, %s46, %s47
      %p51 = pneg %p45
      %p52 = scmp.eq.s32.totalorder %s15, 1
      %p53 = por %p51, %p52
      %p54 = scmp.ne.s32.totalorder %s46, %s49
      %p55 = scmp.eq.s32.totalorder %s15, 0
      %p56 = por %p54, %p55
      %p57 = scmp.ne.s32.totalorder %s46, %s49
      %p58 = scmp.eq.s32.totalorder %s20, 1
      %p59 = por %p57, %p58
      %p60 = scmp.ne.s32.totalorder %s49, %s50
      %p61 = scmp.eq.s32.totalorder %s20, 0
      %p62 = por %p60, %p61
      %p63 = scmp.ne.s32.totalorder %s49, %s50
      %p64 = scmp.eq.s32.totalorder %s21, 1
      %p65 = por %p63, %p64
      %p67 = scmp.ne.s32.totalorder %s50, %s66
      %p68 = scmp.eq.s32.totalorder %s21, 0
      %p69 = por %p67, %p68
      %s70 = ssub.s32 %s15, %s22
      %p71 = scmp.eq.s32.totalorder %s70, 0
      %s73 = sadd.s32 %s72, 1
      %s74 = scalar_select %p71, %s72, %s73
      %p77 = pneg %p71
      %p78 = scmp.eq.s32.totalorder %s15, 1
      %p79 = por %p77, %p78
      %p80 = scmp.ne.s32.totalorder %s72, %s75
      %p81 = scmp.eq.s32.totalorder %s15, 0
      %p82 = por %p80, %p81
      %p83 = scmp.ne.s32.totalorder %s72, %s75
      %p84 = scmp.eq.s32.totalorder %s20, 1
      %p85 = por %p83, %p84
      %p86 = scmp.ne.s32.totalorder %s75, %s76
      %p87 = scmp.eq.s32.totalorder %s20, 0
      %p88 = por %p86, %p87
      %p89 = scmp.ne.s32.totalorder %s75, %s76
      %p90 = scmp.eq.s32.totalorder %s21, 1
      %p91 = por %p89, %p90
      %p93 = scmp.ne.s32.totalorder %s76, %s92
      %p94 = scmp.eq.s32.totalorder %s21, 0
      %p95 = por %p93, %p94
      %p96 = scmp.le.s32.totalorder 1, %s15
      %p97 = scmp.lt.s32.totalorder %s15, 3
      %p98 = pnand %p96, %p97
      %p99 = pneg %p98
      // Predicated region
      $region9: #{tpu_custom_call.1} parent=5 // pred_check
        _
      $region10: #{tpu_custom_call.1} parent=5 // pred_check_branch
        %101 = sbr.rel (%p98) target = $region12
      $region11: #{tpu_custom_call.1} parent=5 // pred_region
        %s102 = ssub.s32 %s15, 1
        // Predicated region
        $region13: #{tpu_custom_call.1} parent=11 // pred_check
          %p103 = pneg %p36
        $region14: #{tpu_custom_call.1} parent=11 // pred_check_branch
          %105 = sbr.rel (%p103) target = $region16
        $region15: #{tpu_custom_call.1} parent=11 // pred_region
          %s107 = ssub.s32 16, 16
          %108 = vsyncadd [#allocation3], %s107
          %s110 = sshll.u32 [#allocation2], 4
          %s111 = int_to_ptr.vmem [resolvable:$true] %s110
          %113 = dma.hbm_to_vmem [thread:$0]  %s0, 16, %s111, [#allocation3]
        $region16: #{tpu_custom_call.1} parent=11 // pred_fallthru
          _
      $region12: #{tpu_custom_call.1} parent=5 // pred_fallthru
        _
      %p114 = scmp.lt.s32.totalorder %s15, 2
      // Predicated region
      $region17: #{tpu_custom_call.1} parent=5 // pred_check
        %p115 = pneg %p114
      $region18: #{tpu_custom_call.1} parent=5 // pred_check_branch
        %117 = sbr.rel (%p115) target = $region20
      $region19: #{tpu_custom_call.1} parent=5 // pred_region
        // Predicated region
        $region21: #{tpu_custom_call.1} parent=19 // pred_check
          %p118 = pneg %p56
        $region22: #{tpu_custom_call.1} parent=19 // pred_check_branch
          %120 = sbr.rel (%p118) target = $region24
        $region23: #{tpu_custom_call.1} parent=19 // pred_region
          %s121 = sand.u32 %s46, 1
          %s122 = scalar_lea.sflag [#allocation6], %s121
          %s123 = sand.u32 %s46, 1
          %s124 = smul.addr %s123, 8
          %s125 = scalar_lea.vmem [#allocation5], %s124
          %s127 = ssub.s32 128, 128
          %128 = vsyncadd %s122, %s127
          %s129 = smul.addr %s15, 128
          %s130 = scalar_lea.hbm %s1, %s129
          %s132 = sshll.u32 %s125, 4
          %s133 = int_to_ptr.vmem [resolvable:$true] %s132
          %135 = dma.hbm_to_vmem [thread:$0]  %s130, 128, %s133, %s122
        $region24: #{tpu_custom_call.1} parent=19 // pred_fallthru
          _
      $region20: #{tpu_custom_call.1} parent=5 // pred_fallthru
        _
      %p136 = scmp.le.s32.totalorder 1, %s15
      %p137 = scmp.lt.s32.totalorder %s15, 3
      %p138 = pnand %p136, %p137
      %p139 = pneg %p138
      // Predicated region
      $region25: #{tpu_custom_call.1} parent=5 // pred_check
        _
      $region26: #{tpu_custom_call.1} parent=5 // pred_check_branch
        %141 = sbr.rel (%p138) target = $region28
      $region27: #{tpu_custom_call.1} parent=5 // pred_region
        %s142 = ssub.s32 %s15, 1
        // Predicated region
        $region29: #{tpu_custom_call.1} parent=27 // pred_check
          %p143 = pneg %p36
        $region30: #{tpu_custom_call.1} parent=27 // pred_check_branch
          %145 = sbr.rel (%p143) target = $region32
        $region31: #{tpu_custom_call.1} parent=27 // pred_region
          %146 = dma.done [#allocation3], 16
        $region32: #{tpu_custom_call.1} parent=27 // pred_fallthru
          _
        %s147 = sand.u32 %s49, 1
        %s148 = scalar_lea.sflag [#allocation6], %s147
        %s149 = sand.u32 %s49, 1
        %s150 = smul.addr %s149, 8
        %s151 = scalar_lea.vmem [#allocation5], %s150
        // Predicated region
        $region33: #{tpu_custom_call.1} parent=27 // pred_check
          %p152 = pneg %p62
        $region34: #{tpu_custom_call.1} parent=27 // pred_check_branch
          %154 = sbr.rel (%p152) target = $region36
        $region35: #{tpu_custom_call.1} parent=27 // pred_region
          %155 = dma.done %s148, 128
        $region36: #{tpu_custom_call.1} parent=27 // pred_fallthru
          _
        %p156 = pneg %p36
        %p157 = pneg %p33
        %s158 = sand.u32 %s49, 1
        %s159 = scalar_lea.sflag [#allocation6], %s158
        %s160 = sand.u32 %s49, 1
        %s161 = smul.addr %s160, 8
        %s162 = scalar_lea.vmem [#allocation5], %s161
        %p163 = pneg %p62
        %p164 = pneg %p59
        %p165 = pneg %p88
        %p166 = pneg %p85
        %s167 = sand.u32 %s75, 1
        %s168 = scalar_lea.sflag [#allocation4], %s167
        %s169 = sand.u32 %s75, 1
        %s170 = smul.addr %s169, 8
        %s171 = scalar_lea.vmem [#allocation7], %s170
        %v172 = vld [vmem:[%s151] sm:$0xff]
        %173 = vrot.lane.b32.xlu0 %v172, 120
        %v174 = vpop.permute.xlu0 %173
        %175 = vrot.lane.b32.xlu0 %v172, 8
        %v176 = vpop.permute.xlu0 %175
        %v177 = vld [vmem:[#allocation2] sm:$0x1]
        %vm178 = vcmp.ne.s32.totalorder %v177, 0
        %v179 = vmax.f32 %v172, %v174
        %v180 = vmin.f32 %v172, %v176
        %v181 = vsel %vm178, 1, 0
        %v182 = vlaneseq
        %v183 = vshrl.u32 %v182, 7
        %v184 = vsub.s32 0, %v183
        %v185 = vrot.slane %v181, %v184
        %vm186 = vcmp.eq.s32.totalorder %v185, 1
        %v187 = vsel %vm186, %v179, %v180
        %188 = vst [vmem:[%s171] sm:$0xff] %v187
        %s189 = sand.u32 %s75, 1
        %s190 = scalar_lea.sflag [#allocation4], %s189
        %s191 = sand.u32 %s75, 1
        %s192 = smul.addr %s191, 8
        %s193 = scalar_lea.vmem [#allocation7], %s192
        // Predicated region
        $region37: #{tpu_custom_call.1} parent=27 // pred_check
          %p194 = pneg %p85
        $region38: #{tpu_custom_call.1} parent=27 // pred_check_branch
          %196 = sbr.rel (%p194) target = $region40
        $region39: #{tpu_custom_call.1} parent=27 // pred_region
          %s198 = ssub.s32 128, 128
          %199 = vsyncadd %s190, %s198
          %s200 = smul.addr %s20, 128
          %s201 = scalar_lea.hbm %s2, %s200
          %s203 = sshll.u32 %s193, 4
          %s204 = int_to_ptr.vmem [resolvable:$true] %s203
          %206 = dma.vmem_to_hbm [thread:$0]  %s204, 128, %s201, %s190
        $region40: #{tpu_custom_call.1} parent=27 // pred_fallthru
          _
      $region28: #{tpu_custom_call.1} parent=5 // pred_fallthru
        _
      %p207 = scmp.le.s32.totalorder 2, %s15
      // Predicated region
      $region41: #{tpu_custom_call.1} parent=5 // pred_check
        %p208 = pneg %p207
      $region42: #{tpu_custom_call.1} parent=5 // pred_check_branch
        %210 = sbr.rel (%p208) target = $region44
      $region43: #{tpu_custom_call.1} parent=5 // pred_region
        %s211 = ssub.s32 %s15, 2
        // Predicated region
        $region45: #{tpu_custom_call.1} parent=43 // pred_check
          %p212 = pneg %p91
        $region46: #{tpu_custom_call.1} parent=43 // pred_check_branch
          %214 = sbr.rel (%p212) target = $region48
        $region47: #{tpu_custom_call.1} parent=43 // pred_region
          %s215 = sand.u32 %s76, 1
          %s216 = scalar_lea.sflag [#allocation4], %s215
          %s217 = sand.u32 %s76, 1
          %s218 = smul.addr %s217, 8
          %s219 = scalar_lea.vmem [#allocation7], %s218
          %220 = dma.done %s216, 128
        $region48: #{tpu_custom_call.1} parent=43 // pred_fallthru
          _
      $region44: #{tpu_custom_call.1} parent=5 // pred_fallthru
        _
    $region6: #{tpu_custom_call.1} parent=1 // loop_footer
      %s19 = sadd.s32 1, %s15
    $region7: #{tpu_custom_call.1} parent=1 // loop_footer_branch
      %14 = sbr.rel target = $region3
    $region8: #{tpu_custom_call.1} parent=1 // loop_exit
      _
    %221 = vsyncpa [#allocation3], 1
    %s222 = scalar_lea.sflag [#allocation3], 1
    %223 = vsyncpa %s222, 1
    %224 = vsyncpa [#allocation6], 1
    %s225 = scalar_lea.sflag [#allocation6], 1
    %226 = vsyncpa %s225, 1
    %227 = vsyncpa [#allocation4], 1
    %s228 = scalar_lea.sflag [#allocation4], 1
    %229 = vsyncpa %s228, 1

</llo_original>
